<compile_context>
chip_gen: v7x
topology: tpu7x:2x2x1
jax: 0.10.0
libtpu: 0.0.40
codegen_flags: <defaults>
</compile_context>

<pallas_src>
import jax
import jax.numpy as jnp
import numpy as np
from jax import lax
from jax.experimental import pallas as pl
from jax.experimental.pallas import tpu as pltpu


def _make_gsc_kernel(C, H, W, eps):
    HW = H * W
    inv_hw = 1.0 / float(HW)

    # bias column layout in the packed (C, 5) bias tile
    B_DW1, B_PW1, B_P2, B_DW3, B_PW3 = range(5)

    def kernel(x_ref, dw_ref, b_ref, pw_ref, o_ref):
        x = x_ref[0]                 # (C, HW) f32, lane-dense spatial
        dw = dw_ref[...]             # (C, 18) depthwise taps (layer-major, k = 3*ki+kj)
        b = b_ref[...]               # (C, 5)  biases

        # column-in-row index along the flattened spatial axis
        col = lax.broadcasted_iota(jnp.int32, (1, HW), 1) % W
        m_left = col >= 1            # source column w-1 is in-bounds
        m_right = col < (W - 1)      # source column w+1 is in-bounds

        def inst_norm(v):
            # single-pass per-channel mean / variance over the H*W lanes
            s1 = jnp.sum(v, axis=-1, keepdims=True)
            s2 = jnp.sum(v * v, axis=-1, keepdims=True)
            mu = s1 * inv_hw
            var = jnp.maximum(s2 * inv_hw - mu * mu, 0.0)
            return (v - mu) * lax.rsqrt(var + eps)

        def shift_flat(v, s):
            # out[:, p] = v[:, p + s], zero-filled outside [0, HW)
            if s == 0:
                return v
            z = jnp.zeros((C, abs(s)), jnp.float32)
            if s > 0:
                return jnp.concatenate([v[:, s:], z], axis=1)
            return jnp.concatenate([z, v[:, :HW + s]], axis=1)

        def dw3x3(v, layer):
            # depthwise 3x3, stride 1, zero padding 1; 9 broadcast-FMA taps
            acc = jnp.zeros((C, HW), jnp.float32)
            for di in (-1, 0, 1):
                for dj in (-1, 0, 1):
                    k = 9 * layer + 3 * (di + 1) + (dj + 1)
                    tap = dw[:, k:k + 1]                       # (C, 1)
                    sh = shift_flat(v, di * W + dj)
                    if dj == 1:
                        sh = jnp.where(m_right, sh, 0.0)
                    elif dj == -1:
                        sh = jnp.where(m_left, sh, 0.0)
                    acc = acc + tap * sh
            return acc

        def pw1x1(v, i, bias_col):
            # pointwise 1x1 conv as an MXU matmul over channels, plus bias
            return (jnp.dot(pw_ref[i], v, preferred_element_type=jnp.float32)
                    + b[:, bias_col:bias_col + 1])

        # norm and norm2 are both affine-free InstanceNorm of the same input x,
        # so a single normalization feeds both branch 1 and branch 2.
        xn = inst_norm(x)

        x1 = jnp.maximum(
            pw1x1(dw3x3(xn, 0) + b[:, B_DW1:B_DW1 + 1], 0, B_PW1), 0.0)
        x2 = jnp.maximum(pw1x1(xn, 1, B_P2), 0.0)
        xs = x1 + x2

        x3 = jnp.maximum(
            pw1x1(dw3x3(inst_norm(xs), 1) + b[:, B_DW3:B_DW3 + 1], 2, B_PW3), 0.0)

        o_ref[0] = x3 + x

    return kernel


def gsc_pallas(x, params, *, eps=1e-5):
    N, C, H, W = x.shape
    HW = H * W

    # ---- parameter packing (pure layout glue, no compute) ----
    dw_taps = jnp.concatenate(
        [params["dw1_w"][:, 0].reshape(C, 9),
         params["dw3_w"][:, 0].reshape(C, 9)], axis=1).astype(jnp.float32)      # (C, 18)
    biases = jnp.stack(
        [params["dw1_b"], params["pw1_b"], params["p2_b"],
         params["dw3_b"], params["pw3_b"]], axis=1).astype(jnp.float32)          # (C, 5)
    pw_w = jnp.stack(
        [params["pw1_w"][:, :, 0, 0], params["p2_w"][:, :, 0, 0],
         params["pw3_w"][:, :, 0, 0]], axis=0).astype(jnp.float32)               # (3, C, C)

    x_flat = x.reshape(N, C, HW).astype(jnp.float32)

    kernel = _make_gsc_kernel(C, H, W, eps)

    grid_spec = pltpu.PrefetchScalarGridSpec(
        num_scalar_prefetch=0,
        grid=(N,),
        in_specs=[
            pl.BlockSpec((1, C, HW), lambda n: (n, 0, 0)),   # x, lane-dense spatial
            pl.BlockSpec((C, 18), lambda n: (0, 0)),         # depthwise taps
            pl.BlockSpec((C, 5), lambda n: (0, 0)),          # biases
            pl.BlockSpec((3, C, C), lambda n: (0, 0, 0)),    # pointwise weights
        ],
        out_specs=pl.BlockSpec((1, C, HW), lambda n: (n, 0, 0)),
    )

    out = pl.pallas_call(
        kernel,
        out_shape=jax.ShapeDtypeStruct((N, C, HW), jnp.float32),
        grid_spec=grid_spec,
        compiler_params=pltpu.CompilerParams(
            dimension_semantics=("parallel",)),
    )(x_flat, dw_taps, biases, pw_w)

    return out.reshape(N, C, H, W)


# --- pure-JAX reference (independent path via lax.conv) for verification ---
def _inst_norm_ref(x, eps=1e-5):
    mu = x.mean(axis=(2, 3), keepdims=True)
    var = ((x - mu) ** 2).mean(axis=(2, 3), keepdims=True)
    return (x - mu) / jnp.sqrt(var + eps)


def gsc_ref(x, params, *, eps=1e-5):
    C = x.shape[1]

    def conv(v, w, groups=1):
        return lax.conv_general_dilated(
            v, w, (1, 1), "SAME",
            dimension_numbers=("NCHW", "OIHW", "NCHW"),
            feature_group_count=groups)

    def dwpw(v, dw_w, dw_b, pw_w, pw_b):
        d = conv(v, dw_w, groups=C) + dw_b.reshape(1, C, 1, 1)
        return conv(d, pw_w) + pw_b.reshape(1, C, 1, 1)

    x1 = jax.nn.relu(dwpw(_inst_norm_ref(x, eps),
                          params["dw1_w"], params["dw1_b"],
                          params["pw1_w"], params["pw1_b"]))
    x2 = jax.nn.relu(conv(_inst_norm_ref(x, eps), params["p2_w"])
                     + params["p2_b"].reshape(1, C, 1, 1))
    xs = x1 + x2
    x3 = jax.nn.relu(dwpw(_inst_norm_ref(xs, eps),
                          params["dw3_w"], params["dw3_b"],
                          params["pw3_w"], params["pw3_b"]))
    return x3 + x


if __name__ == "__main__":
    # spatial_dims=2, in_channels=8 (InstanceNorm2d, affine=False)
    N, C, H, W = 2, 8, 16, 16

    key = jax.random.PRNGKey(0)
    ks = jax.random.split(key, 12)
    x = jax.random.normal(ks[0], (N, C, H, W), dtype=jnp.float32)

    params = {
        # proj: depthwise 3x3 (groups=C) + pointwise 1x1, both with bias
        "dw1_w": 0.2 * jax.random.normal(ks[1], (C, 1, 3, 3), jnp.float32),
        "dw1_b": 0.1 * jax.random.normal(ks[2], (C,), jnp.float32),
        "pw1_w": 0.2 * jax.random.normal(ks[3], (C, C, 1, 1), jnp.float32),
        "pw1_b": 0.1 * jax.random.normal(ks[4], (C,), jnp.float32),
        # proj2: 1x1 conv with bias
        "p2_w": 0.2 * jax.random.normal(ks[5], (C, C, 1, 1), jnp.float32),
        "p2_b": 0.1 * jax.random.normal(ks[6], (C,), jnp.float32),
        # proj3: depthwise 3x3 + pointwise 1x1, both with bias
        "dw3_w": 0.2 * jax.random.normal(ks[7], (C, 1, 3, 3), jnp.float32),
        "dw3_b": 0.1 * jax.random.normal(ks[8], (C,), jnp.float32),
        "pw3_w": 0.2 * jax.random.normal(ks[9], (C, C, 1, 1), jnp.float32),
        "pw3_b": 0.1 * jax.random.normal(ks[10], (C,), jnp.float32),
    }

    out = jax.block_until_ready(gsc_pallas(x, params))
    ref = gsc_ref(x, params)
    np.testing.assert_allclose(np.asarray(out), np.asarray(ref), rtol=2e-3, atol=2e-3)
    print("KERNEL_OK")
</pallas_src>

<mosaic_0001>
module attributes {stable_mosaic.version = 11 : i64} {
  func.func @kernel(%arg0: i32, %arg1: memref<1x8x256xf32, #tpu.memory_space<vmem>>, %arg2: memref<8x18xf32, #tpu.memory_space<vmem>>, %arg3: memref<8x5xf32, #tpu.memory_space<vmem>>, %arg4: memref<3x8x8xf32, #tpu.memory_space<vmem>>, %arg5: memref<1x8x256xf32, #tpu.memory_space<vmem>>) attributes {dimension_semantics = [#tpu.dimension_semantics<parallel>], iteration_bounds = array<i64: 2>, scalar_prefetch = 0 : i64, scratch_operands = 0 : i64, tpu.core_type = #tpu.core_type<tc>, window_params = [{transform_indices = @transform_0, window_bounds = array<i64: 1, 8, 256>}, {pipeline_mode = #tpu.pipeline_mode<synchronous>, transform_indices = @transform_1, window_bounds = array<i64: 8, 18>}, {pipeline_mode = #tpu.pipeline_mode<synchronous>, transform_indices = @transform_2, window_bounds = array<i64: 8, 5>}, {pipeline_mode = #tpu.pipeline_mode<synchronous>, transform_indices = @transform_3, window_bounds = array<i64: 3, 8, 8>}, {transform_indices = @transform_4, window_bounds = array<i64: 1, 8, 256>}]} {
    %c0 = arith.constant 0 : index
    %c0_0 = arith.constant 0 : index
    %c0_1 = arith.constant 0 : index
    %0 = vector.load %arg1[%c0, %c0_0, %c0_1] : memref<1x8x256xf32, #tpu.memory_space<vmem>>, vector<1x8x256xf32>
    %1 = vector.shape_cast %0 : vector<1x8x256xf32> to vector<8x256xf32>
    %c0_2 = arith.constant 0 : index
    %c0_3 = arith.constant 0 : index
    %2 = vector.load %arg2[%c0_2, %c0_3] : memref<8x18xf32, #tpu.memory_space<vmem>>, vector<8x18xf32>
    %c0_4 = arith.constant 0 : index
    %c0_5 = arith.constant 0 : index
    %3 = vector.load %arg3[%c0_4, %c0_5] : memref<8x5xf32, #tpu.memory_space<vmem>>, vector<8x5xf32>
    %4 = tpu.iota {dimensions = array<i32: 1>} : vector<1x256xi32>
    %c16_i32 = arith.constant 16 : i32
    %c0_i32 = arith.constant 0 : i32
    %5 = arith.cmpi eq, %c16_i32, %c0_i32 : i32
    %c1_i32 = arith.constant 1 : i32
    %6 = arith.select %5, %c1_i32, %c16_i32 : i32
    %7 = vector.broadcast %6 : i32 to vector<1x256xi32>
    %8 = arith.remsi %4, %7 : vector<1x256xi32>
    %c0_i32_6 = arith.constant 0 : i32
    %9 = vector.broadcast %c0_i32_6 : i32 to vector<1x256xi32>
    %10 = arith.cmpi ne, %8, %9 : vector<1x256xi32>
    %c0_i32_7 = arith.constant 0 : i32
    %11 = vector.broadcast %c0_i32_7 : i32 to vector<1x256xi32>
    %12 = arith.cmpi slt, %8, %11 : vector<1x256xi32>
    %c0_i32_8 = arith.constant 0 : i32
    %13 = arith.cmpi slt, %6, %c0_i32_8 : i32
    %14 = vector.broadcast %13 : i1 to vector<1x256xi1>
    %15 = vector.broadcast %14 : vector<1x256xi1> to vector<1x256xi1>
    %16 = arith.xori %12, %15 : vector<1x256xi1>
    %17 = arith.andi %16, %10 : vector<1x256xi1>
    %18 = vector.broadcast %6 : i32 to vector<1x256xi32>
    %19 = arith.addi %8, %18 : vector<1x256xi32>
    %20 = arith.select %17, %19, %8 : vector<1x256xi1>, vector<1x256xi32>
    %c1_i32_9 = arith.constant 1 : i32
    %21 = vector.broadcast %c1_i32_9 : i32 to vector<1x256xi32>
    %22 = arith.cmpi sge, %20, %21 : vector<1x256xi32>
    %c15_i32 = arith.constant 15 : i32
    %23 = vector.broadcast %c15_i32 : i32 to vector<1x256xi32>
    %24 = arith.cmpi slt, %20, %23 : vector<1x256xi32>
    %cst = arith.constant dense<0.000000e+00> : vector<8xf32>
    %25 = vector.multi_reduction <add>, %1, %cst [1] : vector<8x256xf32> to vector<8xf32>
    %26 = vector.shape_cast %25 : vector<8xf32> to vector<8x1xf32>
    %27 = arith.mulf %1, %1 : vector<8x256xf32>
    %cst_10 = arith.constant dense<0.000000e+00> : vector<8xf32>
    %28 = vector.multi_reduction <add>, %27, %cst_10 [1] : vector<8x256xf32> to vector<8xf32>
    %29 = vector.shape_cast %28 : vector<8xf32> to vector<8x1xf32>
    %cst_11 = arith.constant 3.906250e-03 : f32
    %30 = vector.broadcast %cst_11 : f32 to vector<8x1xf32>
    %31 = arith.mulf %26, %30 : vector<8x1xf32>
    %cst_12 = arith.constant 3.906250e-03 : f32
    %32 = vector.broadcast %cst_12 : f32 to vector<8x1xf32>
    %33 = arith.mulf %29, %32 : vector<8x1xf32>
    %34 = arith.mulf %31, %31 : vector<8x1xf32>
    %35 = arith.subf %33, %34 : vector<8x1xf32>
    %cst_13 = arith.constant 0.000000e+00 : f32
    %36 = vector.broadcast %cst_13 : f32 to vector<8x1xf32>
    %37 = arith.maximumf %35, %36 : vector<8x1xf32>
    %38 = vector.broadcast %31 : vector<8x1xf32> to vector<8x256xf32>
    %39 = arith.subf %1, %38 : vector<8x256xf32>
    %cst_14 = arith.constant 9.99999974E-6 : f32
    %40 = vector.broadcast %cst_14 : f32 to vector<8x1xf32>
    %41 = arith.addf %37, %40 : vector<8x1xf32>
    %42 = math.rsqrt %41 : vector<8x1xf32>
    %43 = vector.broadcast %42 : vector<8x1xf32> to vector<8x256xf32>
    %44 = arith.mulf %39, %43 : vector<8x256xf32>
    %cst_15 = arith.constant 0.000000e+00 : f32
    %45 = vector.broadcast %cst_15 : f32 to vector<8x256xf32>
    %46 = vector.extract_strided_slice %2 {offsets = [0, 0], sizes = [8, 1], strides = [1, 1]} : vector<8x18xf32> to vector<8x1xf32>
    %cst_16 = arith.constant 0.000000e+00 : f32
    %47 = vector.broadcast %cst_16 : f32 to vector<8x17xf32>
    %48 = vector.extract_strided_slice %44 {offsets = [0, 0], sizes = [8, 239], strides = [1, 1]} : vector<8x256xf32> to vector<8x239xf32>
    %49 = tpu.concatenate %47, %48 in 1 : vector<8x17xf32>, vector<8x239xf32> -> vector<8x256xf32>
    %cst_17 = arith.constant 0.000000e+00 : f32
    %50 = vector.shape_cast %22 : vector<1x256xi1> to vector<1x256xi1>
    %51 = vector.broadcast %50 : vector<1x256xi1> to vector<8x256xi1>
    %52 = vector.broadcast %cst_17 : f32 to vector<8x256xf32>
    %53 = arith.select %51, %49, %52 : vector<8x256xi1>, vector<8x256xf32>
    %54 = vector.broadcast %46 : vector<8x1xf32> to vector<8x256xf32>
    %55 = arith.mulf %54, %53 : vector<8x256xf32>
    %56 = arith.addf %45, %55 : vector<8x256xf32>
    %57 = vector.extract_strided_slice %2 {offsets = [0, 1], sizes = [8, 1], strides = [1, 1]} : vector<8x18xf32> to vector<8x1xf32>
    %cst_18 = arith.constant 0.000000e+00 : f32
    %58 = vector.broadcast %cst_18 : f32 to vector<8x16xf32>
    %59 = vector.extract_strided_slice %44 {offsets = [0, 0], sizes = [8, 240], strides = [1, 1]} : vector<8x256xf32> to vector<8x240xf32>
    %60 = tpu.concatenate %58, %59 in 1 : vector<8x16xf32>, vector<8x240xf32> -> vector<8x256xf32>
    %61 = vector.broadcast %57 : vector<8x1xf32> to vector<8x256xf32>
    %62 = arith.mulf %61, %60 : vector<8x256xf32>
    %63 = arith.addf %56, %62 : vector<8x256xf32>
    %64 = vector.extract_strided_slice %2 {offsets = [0, 2], sizes = [8, 1], strides = [1, 1]} : vector<8x18xf32> to vector<8x1xf32>
    %cst_19 = arith.constant 0.000000e+00 : f32
    %65 = vector.broadcast %cst_19 : f32 to vector<8x15xf32>
    %66 = vector.extract_strided_slice %44 {offsets = [0, 0], sizes = [8, 241], strides = [1, 1]} : vector<8x256xf32> to vector<8x241xf32>
    %67 = tpu.concatenate %65, %66 in 1 : vector<8x15xf32>, vector<8x241xf32> -> vector<8x256xf32>
    %cst_20 = arith.constant 0.000000e+00 : f32
    %68 = vector.shape_cast %24 : vector<1x256xi1> to vector<1x256xi1>
    %69 = vector.broadcast %68 : vector<1x256xi1> to vector<8x256xi1>
    %70 = vector.broadcast %cst_20 : f32 to vector<8x256xf32>
    %71 = arith.select %69, %67, %70 : vector<8x256xi1>, vector<8x256xf32>
    %72 = vector.broadcast %64 : vector<8x1xf32> to vector<8x256xf32>
    %73 = arith.mulf %72, %71 : vector<8x256xf32>
    %74 = arith.addf %63, %73 : vector<8x256xf32>
    %75 = vector.extract_strided_slice %2 {offsets = [0, 3], sizes = [8, 1], strides = [1, 1]} : vector<8x18xf32> to vector<8x1xf32>
    %cst_21 = arith.constant 0.000000e+00 : f32
    %76 = vector.broadcast %cst_21 : f32 to vector<8x1xf32>
    %77 = vector.extract_strided_slice %44 {offsets = [0, 0], sizes = [8, 255], strides = [1, 1]} : vector<8x256xf32> to vector<8x255xf32>
    %78 = tpu.concatenate %76, %77 in 1 : vector<8x1xf32>, vector<8x255xf32> -> vector<8x256xf32>
    %cst_22 = arith.constant 0.000000e+00 : f32
    %79 = vector.shape_cast %22 : vector<1x256xi1> to vector<1x256xi1>
    %80 = vector.broadcast %79 : vector<1x256xi1> to vector<8x256xi1>
    %81 = vector.broadcast %cst_22 : f32 to vector<8x256xf32>
    %82 = arith.select %80, %78, %81 : vector<8x256xi1>, vector<8x256xf32>
    %83 = vector.broadcast %75 : vector<8x1xf32> to vector<8x256xf32>
    %84 = arith.mulf %83, %82 : vector<8x256xf32>
    %85 = arith.addf %74, %84 : vector<8x256xf32>
    %86 = vector.extract_strided_slice %2 {offsets = [0, 4], sizes = [8, 1], strides = [1, 1]} : vector<8x18xf32> to vector<8x1xf32>
    %87 = vector.broadcast %86 : vector<8x1xf32> to vector<8x256xf32>
    %88 = arith.mulf %87, %44 : vector<8x256xf32>
    %89 = arith.addf %85, %88 : vector<8x256xf32>
    %90 = vector.extract_strided_slice %2 {offsets = [0, 5], sizes = [8, 1], strides = [1, 1]} : vector<8x18xf32> to vector<8x1xf32>
    %cst_23 = arith.constant 0.000000e+00 : f32
    %91 = vector.broadcast %cst_23 : f32 to vector<8x1xf32>
    %92 = vector.extract_strided_slice %44 {offsets = [0, 1], sizes = [8, 255], strides = [1, 1]} : vector<8x256xf32> to vector<8x255xf32>
    %93 = tpu.concatenate %92, %91 in 1 : vector<8x255xf32>, vector<8x1xf32> -> vector<8x256xf32>
    %cst_24 = arith.constant 0.000000e+00 : f32
    %94 = vector.shape_cast %24 : vector<1x256xi1> to vector<1x256xi1>
    %95 = vector.broadcast %94 : vector<1x256xi1> to vector<8x256xi1>
    %96 = vector.broadcast %cst_24 : f32 to vector<8x256xf32>
    %97 = arith.select %95, %93, %96 : vector<8x256xi1>, vector<8x256xf32>
    %98 = vector.broadcast %90 : vector<8x1xf32> to vector<8x256xf32>
    %99 = arith.mulf %98, %97 : vector<8x256xf32>
    %100 = arith.addf %89, %99 : vector<8x256xf32>
    %101 = vector.extract_strided_slice %2 {offsets = [0, 6], sizes = [8, 1], strides = [1, 1]} : vector<8x18xf32> to vector<8x1xf32>
    %cst_25 = arith.constant 0.000000e+00 : f32
    %102 = vector.broadcast %cst_25 : f32 to vector<8x15xf32>
    %103 = vector.extract_strided_slice %44 {offsets = [0, 15], sizes = [8, 241], strides = [1, 1]} : vector<8x256xf32> to vector<8x241xf32>
    %104 = tpu.concatenate %103, %102 in 1 : vector<8x241xf32>, vector<8x15xf32> -> vector<8x256xf32>
    %cst_26 = arith.constant 0.000000e+00 : f32
    %105 = vector.shape_cast %22 : vector<1x256xi1> to vector<1x256xi1>
    %106 = vector.broadcast %105 : vector<1x256xi1> to vector<8x256xi1>
    %107 = vector.broadcast %cst_26 : f32 to vector<8x256xf32>
    %108 = arith.select %106, %104, %107 : vector<8x256xi1>, vector<8x256xf32>
    %109 = vector.broadcast %101 : vector<8x1xf32> to vector<8x256xf32>
    %110 = arith.mulf %109, %108 : vector<8x256xf32>
    %111 = arith.addf %100, %110 : vector<8x256xf32>
    %112 = vector.extract_strided_slice %2 {offsets = [0, 7], sizes = [8, 1], strides = [1, 1]} : vector<8x18xf32> to vector<8x1xf32>
    %cst_27 = arith.constant 0.000000e+00 : f32
    %113 = vector.broadcast %cst_27 : f32 to vector<8x16xf32>
    %114 = vector.extract_strided_slice %44 {offsets = [0, 16], sizes = [8, 240], strides = [1, 1]} : vector<8x256xf32> to vector<8x240xf32>
    %115 = tpu.concatenate %114, %113 in 1 : vector<8x240xf32>, vector<8x16xf32> -> vector<8x256xf32>
    %116 = vector.broadcast %112 : vector<8x1xf32> to vector<8x256xf32>
    %117 = arith.mulf %116, %115 : vector<8x256xf32>
    %118 = arith.addf %111, %117 : vector<8x256xf32>
    %119 = vector.extract_strided_slice %2 {offsets = [0, 8], sizes = [8, 1], strides = [1, 1]} : vector<8x18xf32> to vector<8x1xf32>
    %cst_28 = arith.constant 0.000000e+00 : f32
    %120 = vector.broadcast %cst_28 : f32 to vector<8x17xf32>
    %121 = vector.extract_strided_slice %44 {offsets = [0, 17], sizes = [8, 239], strides = [1, 1]} : vector<8x256xf32> to vector<8x239xf32>
    %122 = tpu.concatenate %121, %120 in 1 : vector<8x239xf32>, vector<8x17xf32> -> vector<8x256xf32>
    %cst_29 = arith.constant 0.000000e+00 : f32
    %123 = vector.shape_cast %24 : vector<1x256xi1> to vector<1x256xi1>
    %124 = vector.broadcast %123 : vector<1x256xi1> to vector<8x256xi1>
    %125 = vector.broadcast %cst_29 : f32 to vector<8x256xf32>
    %126 = arith.select %124, %122, %125 : vector<8x256xi1>, vector<8x256xf32>
    %127 = vector.broadcast %119 : vector<8x1xf32> to vector<8x256xf32>
    %128 = arith.mulf %127, %126 : vector<8x256xf32>
    %129 = arith.addf %118, %128 : vector<8x256xf32>
    %130 = vector.extract_strided_slice %3 {offsets = [0, 0], sizes = [8, 1], strides = [1, 1]} : vector<8x5xf32> to vector<8x1xf32>
    %131 = vector.broadcast %130 : vector<8x1xf32> to vector<8x256xf32>
    %132 = arith.addf %129, %131 : vector<8x256xf32>
    %c0_30 = arith.constant 0 : index
    %c0_31 = arith.constant 0 : index
    %c0_32 = arith.constant 0 : index
    %133 = vector.load %arg4[%c0_30, %c0_31, %c0_32] : memref<3x8x8xf32, #tpu.memory_space<vmem>>, vector<1x8x8xf32>
    %134 = vector.shape_cast %133 : vector<1x8x8xf32> to vector<8x8xf32>
    %cst_33 = arith.constant dense<0.000000e+00> : vector<8x256xf32>
    %135 = tpu.matmul %134, %132, %cst_33 {dimension_numbers = #tpu.dot_dimension_numbers<[1], [0], [0], [1], [0, 0, 1, 1], [], []>} : vector<8x8xf32>, vector<8x256xf32>, vector<8x256xf32> -> vector<8x256xf32>
    %136 = vector.extract_strided_slice %3 {offsets = [0, 1], sizes = [8, 1], strides = [1, 1]} : vector<8x5xf32> to vector<8x1xf32>
    %137 = vector.broadcast %136 : vector<8x1xf32> to vector<8x256xf32>
    %138 = arith.addf %135, %137 : vector<8x256xf32>
    %cst_34 = arith.constant 0.000000e+00 : f32
    %139 = vector.broadcast %cst_34 : f32 to vector<8x256xf32>
    %140 = arith.maximumf %138, %139 : vector<8x256xf32>
    %c1 = arith.constant 1 : index
    %c0_35 = arith.constant 0 : index
    %c0_36 = arith.constant 0 : index
    %141 = vector.load %arg4[%c1, %c0_35, %c0_36] : memref<3x8x8xf32, #tpu.memory_space<vmem>>, vector<1x8x8xf32>
    %142 = vector.shape_cast %141 : vector<1x8x8xf32> to vector<8x8xf32>
    %cst_37 = arith.constant dense<0.000000e+00> : vector<8x256xf32>
    %143 = tpu.matmul %142, %44, %cst_37 {dimension_numbers = #tpu.dot_dimension_numbers<[1], [0], [0], [1], [0, 0, 1, 1], [], []>} : vector<8x8xf32>, vector<8x256xf32>, vector<8x256xf32> -> vector<8x256xf32>
    %144 = vector.extract_strided_slice %3 {offsets = [0, 2], sizes = [8, 1], strides = [1, 1]} : vector<8x5xf32> to vector<8x1xf32>
    %145 = vector.broadcast %144 : vector<8x1xf32> to vector<8x256xf32>
    %146 = arith.addf %143, %145 : vector<8x256xf32>
    %cst_38 = arith.constant 0.000000e+00 : f32
    %147 = vector.broadcast %cst_38 : f32 to vector<8x256xf32>
    %148 = arith.maximumf %146, %147 : vector<8x256xf32>
    %149 = arith.addf %140, %148 : vector<8x256xf32>
    %cst_39 = arith.constant dense<0.000000e+00> : vector<8xf32>
    %150 = vector.multi_reduction <add>, %149, %cst_39 [1] : vector<8x256xf32> to vector<8xf32>
    %151 = vector.shape_cast %150 : vector<8xf32> to vector<8x1xf32>
    %152 = arith.mulf %149, %149 : vector<8x256xf32>
    %cst_40 = arith.constant dense<0.000000e+00> : vector<8xf32>
    %153 = vector.multi_reduction <add>, %152, %cst_40 [1] : vector<8x256xf32> to vector<8xf32>
    %154 = vector.shape_cast %153 : vector<8xf32> to vector<8x1xf32>
    %cst_41 = arith.constant 3.906250e-03 : f32
    %155 = vector.broadcast %cst_41 : f32 to vector<8x1xf32>
    %156 = arith.mulf %151, %155 : vector<8x1xf32>
    %cst_42 = arith.constant 3.906250e-03 : f32
    %157 = vector.broadcast %cst_42 : f32 to vector<8x1xf32>
    %158 = arith.mulf %154, %157 : vector<8x1xf32>
    %159 = arith.mulf %156, %156 : vector<8x1xf32>
    %160 = arith.subf %158, %159 : vector<8x1xf32>
    %cst_43 = arith.constant 0.000000e+00 : f32
    %161 = vector.broadcast %cst_43 : f32 to vector<8x1xf32>
    %162 = arith.maximumf %160, %161 : vector<8x1xf32>
    %163 = vector.broadcast %156 : vector<8x1xf32> to vector<8x256xf32>
    %164 = arith.subf %149, %163 : vector<8x256xf32>
    %cst_44 = arith.constant 9.99999974E-6 : f32
    %165 = vector.broadcast %cst_44 : f32 to vector<8x1xf32>
    %166 = arith.addf %162, %165 : vector<8x1xf32>
    %167 = math.rsqrt %166 : vector<8x1xf32>
    %168 = vector.broadcast %167 : vector<8x1xf32> to vector<8x256xf32>
    %169 = arith.mulf %164, %168 : vector<8x256xf32>
    %cst_45 = arith.constant 0.000000e+00 : f32
    %170 = vector.broadcast %cst_45 : f32 to vector<8x256xf32>
    %171 = vector.extract_strided_slice %2 {offsets = [0, 9], sizes = [8, 1], strides = [1, 1]} : vector<8x18xf32> to vector<8x1xf32>
    %cst_46 = arith.constant 0.000000e+00 : f32
    %172 = vector.broadcast %cst_46 : f32 to vector<8x17xf32>
    %173 = vector.extract_strided_slice %169 {offsets = [0, 0], sizes = [8, 239], strides = [1, 1]} : vector<8x256xf32> to vector<8x239xf32>
    %174 = tpu.concatenate %172, %173 in 1 : vector<8x17xf32>, vector<8x239xf32> -> vector<8x256xf32>
    %cst_47 = arith.constant 0.000000e+00 : f32
    %175 = vector.shape_cast %22 : vector<1x256xi1> to vector<1x256xi1>
    %176 = vector.broadcast %175 : vector<1x256xi1> to vector<8x256xi1>
    %177 = vector.broadcast %cst_47 : f32 to vector<8x256xf32>
    %178 = arith.select %176, %174, %177 : vector<8x256xi1>, vector<8x256xf32>
    %179 = vector.broadcast %171 : vector<8x1xf32> to vector<8x256xf32>
    %180 = arith.mulf %179, %178 : vector<8x256xf32>
    %181 = arith.addf %170, %180 : vector<8x256xf32>
    %182 = vector.extract_strided_slice %2 {offsets = [0, 10], sizes = [8, 1], strides = [1, 1]} : vector<8x18xf32> to vector<8x1xf32>
    %cst_48 = arith.constant 0.000000e+00 : f32
    %183 = vector.broadcast %cst_48 : f32 to vector<8x16xf32>
    %184 = vector.extract_strided_slice %169 {offsets = [0, 0], sizes = [8, 240], strides = [1, 1]} : vector<8x256xf32> to vector<8x240xf32>
    %185 = tpu.concatenate %183, %184 in 1 : vector<8x16xf32>, vector<8x240xf32> -> vector<8x256xf32>
    %186 = vector.broadcast %182 : vector<8x1xf32> to vector<8x256xf32>
    %187 = arith.mulf %186, %185 : vector<8x256xf32>
    %188 = arith.addf %181, %187 : vector<8x256xf32>
    %189 = vector.extract_strided_slice %2 {offsets = [0, 11], sizes = [8, 1], strides = [1, 1]} : vector<8x18xf32> to vector<8x1xf32>
    %cst_49 = arith.constant 0.000000e+00 : f32
    %190 = vector.broadcast %cst_49 : f32 to vector<8x15xf32>
    %191 = vector.extract_strided_slice %169 {offsets = [0, 0], sizes = [8, 241], strides = [1, 1]} : vector<8x256xf32> to vector<8x241xf32>
    %192 = tpu.concatenate %190, %191 in 1 : vector<8x15xf32>, vector<8x241xf32> -> vector<8x256xf32>
    %cst_50 = arith.constant 0.000000e+00 : f32
    %193 = vector.shape_cast %24 : vector<1x256xi1> to vector<1x256xi1>
    %194 = vector.broadcast %193 : vector<1x256xi1> to vector<8x256xi1>
    %195 = vector.broadcast %cst_50 : f32 to vector<8x256xf32>
    %196 = arith.select %194, %192, %195 : vector<8x256xi1>, vector<8x256xf32>
    %197 = vector.broadcast %189 : vector<8x1xf32> to vector<8x256xf32>
    %198 = arith.mulf %197, %196 : vector<8x256xf32>
    %199 = arith.addf %188, %198 : vector<8x256xf32>
    %200 = vector.extract_strided_slice %2 {offsets = [0, 12], sizes = [8, 1], strides = [1, 1]} : vector<8x18xf32> to vector<8x1xf32>
    %cst_51 = arith.constant 0.000000e+00 : f32
    %201 = vector.broadcast %cst_51 : f32 to vector<8x1xf32>
    %202 = vector.extract_strided_slice %169 {offsets = [0, 0], sizes = [8, 255], strides = [1, 1]} : vector<8x256xf32> to vector<8x255xf32>
    %203 = tpu.concatenate %201, %202 in 1 : vector<8x1xf32>, vector<8x255xf32> -> vector<8x256xf32>
    %cst_52 = arith.constant 0.000000e+00 : f32
    %204 = vector.shape_cast %22 : vector<1x256xi1> to vector<1x256xi1>
    %205 = vector.broadcast %204 : vector<1x256xi1> to vector<8x256xi1>
    %206 = vector.broadcast %cst_52 : f32 to vector<8x256xf32>
    %207 = arith.select %205, %203, %206 : vector<8x256xi1>, vector<8x256xf32>
    %208 = vector.broadcast %200 : vector<8x1xf32> to vector<8x256xf32>
    %209 = arith.mulf %208, %207 : vector<8x256xf32>
    %210 = arith.addf %199, %209 : vector<8x256xf32>
    %211 = vector.extract_strided_slice %2 {offsets = [0, 13], sizes = [8, 1], strides = [1, 1]} : vector<8x18xf32> to vector<8x1xf32>
    %212 = vector.broadcast %211 : vector<8x1xf32> to vector<8x256xf32>
    %213 = arith.mulf %212, %169 : vector<8x256xf32>
    %214 = arith.addf %210, %213 : vector<8x256xf32>
    %215 = vector.extract_strided_slice %2 {offsets = [0, 14], sizes = [8, 1], strides = [1, 1]} : vector<8x18xf32> to vector<8x1xf32>
    %cst_53 = arith.constant 0.000000e+00 : f32
    %216 = vector.broadcast %cst_53 : f32 to vector<8x1xf32>
    %217 = vector.extract_strided_slice %169 {offsets = [0, 1], sizes = [8, 255], strides = [1, 1]} : vector<8x256xf32> to vector<8x255xf32>
    %218 = tpu.concatenate %217, %216 in 1 : vector<8x255xf32>, vector<8x1xf32> -> vector<8x256xf32>
    %cst_54 = arith.constant 0.000000e+00 : f32
    %219 = vector.shape_cast %24 : vector<1x256xi1> to vector<1x256xi1>
    %220 = vector.broadcast %219 : vector<1x256xi1> to vector<8x256xi1>
    %221 = vector.broadcast %cst_54 : f32 to vector<8x256xf32>
    %222 = arith.select %220, %218, %221 : vector<8x256xi1>, vector<8x256xf32>
    %223 = vector.broadcast %215 : vector<8x1xf32> to vector<8x256xf32>
    %224 = arith.mulf %223, %222 : vector<8x256xf32>
    %225 = arith.addf %214, %224 : vector<8x256xf32>
    %226 = vector.extract_strided_slice %2 {offsets = [0, 15], sizes = [8, 1], strides = [1, 1]} : vector<8x18xf32> to vector<8x1xf32>
    %cst_55 = arith.constant 0.000000e+00 : f32
    %227 = vector.broadcast %cst_55 : f32 to vector<8x15xf32>
    %228 = vector.extract_strided_slice %169 {offsets = [0, 15], sizes = [8, 241], strides = [1, 1]} : vector<8x256xf32> to vector<8x241xf32>
    %229 = tpu.concatenate %228, %227 in 1 : vector<8x241xf32>, vector<8x15xf32> -> vector<8x256xf32>
    %cst_56 = arith.constant 0.000000e+00 : f32
    %230 = vector.shape_cast %22 : vector<1x256xi1> to vector<1x256xi1>
    %231 = vector.broadcast %230 : vector<1x256xi1> to vector<8x256xi1>
    %232 = vector.broadcast %cst_56 : f32 to vector<8x256xf32>
    %233 = arith.select %231, %229, %232 : vector<8x256xi1>, vector<8x256xf32>
    %234 = vector.broadcast %226 : vector<8x1xf32> to vector<8x256xf32>
    %235 = arith.mulf %234, %233 : vector<8x256xf32>
    %236 = arith.addf %225, %235 : vector<8x256xf32>
    %237 = vector.extract_strided_slice %2 {offsets = [0, 16], sizes = [8, 1], strides = [1, 1]} : vector<8x18xf32> to vector<8x1xf32>
    %cst_57 = arith.constant 0.000000e+00 : f32
    %238 = vector.broadcast %cst_57 : f32 to vector<8x16xf32>
    %239 = vector.extract_strided_slice %169 {offsets = [0, 16], sizes = [8, 240], strides = [1, 1]} : vector<8x256xf32> to vector<8x240xf32>
    %240 = tpu.concatenate %239, %238 in 1 : vector<8x240xf32>, vector<8x16xf32> -> vector<8x256xf32>
    %241 = vector.broadcast %237 : vector<8x1xf32> to vector<8x256xf32>
    %242 = arith.mulf %241, %240 : vector<8x256xf32>
    %243 = arith.addf %236, %242 : vector<8x256xf32>
    %244 = vector.extract_strided_slice %2 {offsets = [0, 17], sizes = [8, 1], strides = [1, 1]} : vector<8x18xf32> to vector<8x1xf32>
    %cst_58 = arith.constant 0.000000e+00 : f32
    %245 = vector.broadcast %cst_58 : f32 to vector<8x17xf32>
    %246 = vector.extract_strided_slice %169 {offsets = [0, 17], sizes = [8, 239], strides = [1, 1]} : vector<8x256xf32> to vector<8x239xf32>
    %247 = tpu.concatenate %246, %245 in 1 : vector<8x239xf32>, vector<8x17xf32> -> vector<8x256xf32>
    %cst_59 = arith.constant 0.000000e+00 : f32
    %248 = vector.shape_cast %24 : vector<1x256xi1> to vector<1x256xi1>
    %249 = vector.broadcast %248 : vector<1x256xi1> to vector<8x256xi1>
    %250 = vector.broadcast %cst_59 : f32 to vector<8x256xf32>
    %251 = arith.select %249, %247, %250 : vector<8x256xi1>, vector<8x256xf32>
    %252 = vector.broadcast %244 : vector<8x1xf32> to vector<8x256xf32>
    %253 = arith.mulf %252, %251 : vector<8x256xf32>
    %254 = arith.addf %243, %253 : vector<8x256xf32>
    %255 = vector.extract_strided_slice %3 {offsets = [0, 3], sizes = [8, 1], strides = [1, 1]} : vector<8x5xf32> to vector<8x1xf32>
    %256 = vector.broadcast %255 : vector<8x1xf32> to vector<8x256xf32>
    %257 = arith.addf %254, %256 : vector<8x256xf32>
    %c2 = arith.constant 2 : index
    %c0_60 = arith.constant 0 : index
    %c0_61 = arith.constant 0 : index
    %258 = vector.load %arg4[%c2, %c0_60, %c0_61] : memref<3x8x8xf32, #tpu.memory_space<vmem>>, vector<1x8x8xf32>
    %259 = vector.shape_cast %258 : vector<1x8x8xf32> to vector<8x8xf32>
    %cst_62 = arith.constant dense<0.000000e+00> : vector<8x256xf32>
    %260 = tpu.matmul %259, %257, %cst_62 {dimension_numbers = #tpu.dot_dimension_numbers<[1], [0], [0], [1], [0, 0, 1, 1], [], []>} : vector<8x8xf32>, vector<8x256xf32>, vector<8x256xf32> -> vector<8x256xf32>
    %261 = vector.extract_strided_slice %3 {offsets = [0, 4], sizes = [8, 1], strides = [1, 1]} : vector<8x5xf32> to vector<8x1xf32>
    %262 = vector.broadcast %261 : vector<8x1xf32> to vector<8x256xf32>
    %263 = arith.addf %260, %262 : vector<8x256xf32>
    %cst_63 = arith.constant 0.000000e+00 : f32
    %264 = vector.broadcast %cst_63 : f32 to vector<8x256xf32>
    %265 = arith.maximumf %263, %264 : vector<8x256xf32>
    %266 = arith.addf %265, %1 : vector<8x256xf32>
    %c0_64 = arith.constant 0 : index
    %c0_65 = arith.constant 0 : index
    %c0_66 = arith.constant 0 : index
    %267 = vector.load %arg5[%c0_64, %c0_65, %c0_66] : memref<1x8x256xf32, #tpu.memory_space<vmem>>, vector<1x8x256xf32>
    %268 = vector.shape_cast %267 : vector<1x8x256xf32> to vector<8x256xf32>
    %269 = vector.shape_cast %266 : vector<8x256xf32> to vector<1x8x256xf32>
    tpu.vector_store %arg5[%c0_64, %c0_65, %c0_66], %269 {strides = array<i32>} : memref<1x8x256xf32, #tpu.memory_space<vmem>>, vector<1x8x256xf32>,
    return
  }
  func.func @transform_0(%arg0: i32) -> (i32, i32, i32) {
    %c0_i32 = arith.constant 0 : i32
    %c0_i32_0 = arith.constant 0 : i32
    %c0_i32_1 = arith.constant 0 : i32
    return %arg0, %c0_i32, %c0_i32_0 : i32, i32, i32
  }
  func.func @transform_1(%arg0: i32) -> (i32, i32) {
    %c0_i32 = arith.constant 0 : i32
    %c0_i32_0 = arith.constant 0 : i32
    %c0_i32_1 = arith.constant 0 : i32
    return %c0_i32, %c0_i32_0 : i32, i32
  }
  func.func @transform_2(%arg0: i32) -> (i32, i32) {
    %c0_i32 = arith.constant 0 : i32
    %c0_i32_0 = arith.constant 0 : i32
    %c0_i32_1 = arith.constant 0 : i32
    return %c0_i32, %c0_i32_0 : i32, i32
  }
  func.func @transform_3(%arg0: i32) -> (i32, i32, i32) {
    %c0_i32 = arith.constant 0 : i32
    %c0_i32_0 = arith.constant 0 : i32
    %c0_i32_1 = arith.constant 0 : i32
    %c0_i32_2 = arith.constant 0 : i32
    return %c0_i32, %c0_i32_0, %c0_i32_1 : i32, i32, i32
  }
  func.func @transform_4(%arg0: i32) -> (i32, i32, i32) {
    %c0_i32 = arith.constant 0 : i32
    %c0_i32_0 = arith.constant 0 : i32
    %c0_i32_1 = arith.constant 0 : i32
    return %arg0, %c0_i32, %c0_i32_0 : i32, i32, i32
  }
}

</mosaic_0001>

<llo_original>
// kernel: tpu_custom_call.1
$region0: #{tpu_custom_call.1}
  #allocation0 [shape = 'u32[]', space=smem, size = 0x4, offset = 0x4, fixed_abs, tag = 'smem constant byte address 0x4 - core index']
  #allocation1 [shape = 'u32[144,128]{1,0:T(1,128)}', space=vmem, size = 0x12000, scoped, tag = 'internal scratch']
  %s0 = inlined_call_operand.hbm [shape: f32[2,8,256], index: 0, kind: input, shape index: {}]
  %s1 = inlined_call_operand.hbm [shape: f32[8,18], index: 1, kind: input, shape index: {}]
  %s2 = inlined_call_operand.hbm [shape: f32[8,5], index: 2, kind: input, shape index: {}]
  %s3 = inlined_call_operand.hbm [shape: f32[3,8,8], index: 3, kind: input, shape index: {}]
  %s4 = inlined_call_operand.hbm [shape: f32[2,8,256], index: 4, kind: output, shape index: {}]
  %s5 = sld [smem:[#allocation0]]
  $region65: #{tpu_custom_call.1} parent=0
    _
  %s7 = ssub.s32 1, %s5
  %s8 = scalar_select 0, %s7, %s5
  $region1: #{tpu_custom_call.1} parent=0
    #allocation2 [shape = 'u8[16384]{0}', space=vmem, size = 0x4000, scoped, tag = 'input window, operand 0']
    #allocation3 [shape = 's32[2]{0}', space=sflag, size = 0x8, scoped, tag = 'scoped memory for tpu_custom_call.1']
    #allocation4 [shape = 's32[2]{0}', space=sflag, size = 0x8, scoped, tag = 'scoped memory for tpu_custom_call.1']
    #allocation5 [shape = 'u8[4096]{0}', space=vmem, size = 0x1000, scoped, tag = 'input window, operand 1, single buffered']
    #allocation6 [shape = 's32[1]{0}', space=sflag, size = 0x4, scoped, tag = 'scoped memory for tpu_custom_call.1']
    #allocation7 [shape = 'u8[4096]{0}', space=vmem, size = 0x1000, scoped, tag = 'input window, operand 2, single buffered']
    #allocation8 [shape = 'u8[12288]{0}', space=vmem, size = 0x3000, scoped, tag = 'input window, operand 3, single buffered']
    #allocation9 [shape = 's32[1]{0}', space=sflag, size = 0x4, scoped, tag = 'scoped memory for tpu_custom_call.1']
    #allocation10 [shape = 'u8[16384]{0}', space=vmem, size = 0x4000, scoped, tag = 'output window, operand 0']
    %9 = vsyncpa [#allocation3], 0
    %s10 = scalar_lea.sflag [#allocation3], 1
    %11 = vsyncpa %s10, 0
    %12 = vsyncpa [#allocation6], 0
    %13 = vsyncpa [#allocation9], 0
    %14 = vsyncpa [#allocation4], 0
    %s15 = scalar_lea.sflag [#allocation4], 1
    %16 = vsyncpa %s15, 0
    loop: start=0, step=1, limit=4
    $region2: #{tpu_custom_call.1} parent=1 // loop_pre_header
      _
    $region3: #{tpu_custom_call.1} parent=1 // loop_header
      %s18 = sphi 0, %s22
      %p19 = scmp.ge.s32.totalorder %s18, 4
      %s28 = sphi 0, %s30
      %s31 = sphi 0, %s28
      %s32 = sphi 0, %s31
      %s48 = sphi 0, %s32
      %s52 = sphi 0, %s52
      %s54 = sphi 0, %s52
      %s55 = sphi 0, %s54
      %s69 = sphi 0, %s55
      %s73 = sphi 0, %s73
      %s75 = sphi 0, %s73
      %s76 = sphi 0, %s75
      %s90 = sphi 0, %s76
      %s94 = sphi 0, %s94
      %s96 = sphi 0, %s94
      %s97 = sphi 0, %s96
      %s111 = sphi 0, %s97
      %s117 = sphi 0, %s119
      %s120 = sphi 0, %s117
      %s121 = sphi 0, %s120
      %s137 = sphi 0, %s121
    $region4: #{tpu_custom_call.1} parent=1 // loop_header_branch
      %21 = sbr.rel (%p19) target = $region8
    $region5: #{tpu_custom_call.1} parent=1 // loop_body
      %s23 = ssub.s32 %s18, 1
      %s24 = ssub.s32 %s18, 2
      %s25 = sadd.s32 %s18, 1
      %s26 = ssub.s32 %s18, %s25
      %p27 = scmp.eq.s32.totalorder %s26, 0
      %s29 = sadd.s32 %s28, 1
      %s30 = scalar_select %p27, %s28, %s29
      %p33 = pneg %p27
      %p34 = scmp.eq.s32.totalorder %s18, 1
      %p35 = por %p33, %p34
      %p36 = scmp.ne.s32.totalorder %s28, %s31
      %p37 = scmp.eq.s32.totalorder %s18, 0
      %p38 = por %p36, %p37
      %p39 = scmp.ne.s32.totalorder %s28, %s31
      %p40 = scmp.eq.s32.totalorder %s23, 1
      %p41 = por %p39, %p40
      %p42 = scmp.ne.s32.totalorder %s31, %s32
      %p43 = scmp.eq.s32.totalorder %s23, 0
      %p44 = por %p42, %p43
      %p45 = scmp.ne.s32.totalorder %s31, %s32
      %p46 = scmp.eq.s32.totalorder %s24, 1
      %p47 = por %p45, %p46
      %p49 = scmp.ne.s32.totalorder %s32, %s48
      %p50 = scmp.eq.s32.totalorder %s24, 0
      %p51 = por %p49, %p50
      %s53 = sadd.s32 %s52, 1
      %p56 = scmp.eq.s32.totalorder %s18, 1
      %p57 = scmp.ne.s32.totalorder %s52, %s54
      %p58 = scmp.eq.s32.totalorder %s18, 0
      %p59 = por %p57, %p58
      %p60 = scmp.ne.s32.totalorder %s52, %s54
      %p61 = scmp.eq.s32.totalorder %s23, 1
      %p62 = por %p60, %p61
      %p63 = scmp.ne.s32.totalorder %s54, %s55
      %p64 = scmp.eq.s32.totalorder %s23, 0
      %p65 = por %p63, %p64
      %p66 = scmp.ne.s32.totalorder %s54, %s55
      %p67 = scmp.eq.s32.totalorder %s24, 1
      %p68 = por %p66, %p67
      %p70 = scmp.ne.s32.totalorder %s55, %s69
      %p71 = scmp.eq.s32.totalorder %s24, 0
      %p72 = por %p70, %p71
      %s74 = sadd.s32 %s73, 1
      %p77 = scmp.eq.s32.totalorder %s18, 1
      %p78 = scmp.ne.s32.totalorder %s73, %s75
      %p79 = scmp.eq.s32.totalorder %s18, 0
      %p80 = por %p78, %p79
      %p81 = scmp.ne.s32.totalorder %s73, %s75
      %p82 = scmp.eq.s32.totalorder %s23, 1
      %p83 = por %p81, %p82
      %p84 = scmp.ne.s32.totalorder %s75, %s76
      %p85 = scmp.eq.s32.totalorder %s23, 0
      %p86 = por %p84, %p85
      %p87 = scmp.ne.s32.totalorder %s75, %s76
      %p88 = scmp.eq.s32.totalorder %s24, 1
      %p89 = por %p87, %p88
      %p91 = scmp.ne.s32.totalorder %s76, %s90
      %p92 = scmp.eq.s32.totalorder %s24, 0
      %p93 = por %p91, %p92
      %s95 = sadd.s32 %s94, 1
      %p98 = scmp.eq.s32.totalorder %s18, 1
      %p99 = scmp.ne.s32.totalorder %s94, %s96
      %p100 = scmp.eq.s32.totalorder %s18, 0
      %p101 = por %p99, %p100
      %p102 = scmp.ne.s32.totalorder %s94, %s96
      %p103 = scmp.eq.s32.totalorder %s23, 1
      %p104 = por %p102, %p103
      %p105 = scmp.ne.s32.totalorder %s96, %s97
      %p106 = scmp.eq.s32.totalorder %s23, 0
      %p107 = por %p105, %p106
      %p108 = scmp.ne.s32.totalorder %s96, %s97
      %p109 = scmp.eq.s32.totalorder %s24, 1
      %p110 = por %p108, %p109
      %p112 = scmp.ne.s32.totalorder %s97, %s111
      %p113 = scmp.eq.s32.totalorder %s24, 0
      %p114 = por %p112, %p113
      %s115 = ssub.s32 %s18, %s25
      %p116 = scmp.eq.s32.totalorder %s115, 0
      %s118 = sadd.s32 %s117, 1
      %s119 = scalar_select %p116, %s117, %s118
      %p122 = pneg %p116
      %p123 = scmp.eq.s32.totalorder %s18, 1
      %p124 = por %p122, %p123
      %p125 = scmp.ne.s32.totalorder %s117, %s120
      %p126 = scmp.eq.s32.totalorder %s18, 0
      %p127 = por %p125, %p126
      %p128 = scmp.ne.s32.totalorder %s117, %s120
      %p129 = scmp.eq.s32.totalorder %s23, 1
      %p130 = por %p128, %p129
      %p131 = scmp.ne.s32.totalorder %s120, %s121
      %p132 = scmp.eq.s32.totalorder %s23, 0
      %p133 = por %p131, %p132
      %p134 = scmp.ne.s32.totalorder %s120, %s121
      %p135 = scmp.eq.s32.totalorder %s24, 1
      %p136 = por %p134, %p135
      %p138 = scmp.ne.s32.totalorder %s121, %s137
      %p139 = scmp.eq.s32.totalorder %s24, 0
      %p140 = por %p138, %p139
      %p141 = scmp.le.s32.totalorder 1, %s18
      %p142 = scmp.lt.s32.totalorder %s18, 3
      %p143 = pnand %p141, %p142
      %p144 = pneg %p143
      // Predicated region
      $region9: #{tpu_custom_call.1} parent=5 // pred_check
        _
      $region10: #{tpu_custom_call.1} parent=5 // pred_check_branch
        %146 = sbr.rel (%p143) target = $region12
      $region11: #{tpu_custom_call.1} parent=5 // pred_region
        %s147 = ssub.s32 %s18, 1
        // Predicated region
        $region13: #{tpu_custom_call.1} parent=11 // pred_check
          %p148 = pneg %p65
        $region14: #{tpu_custom_call.1} parent=11 // pred_check_branch
          %150 = sbr.rel (%p148) target = $region16
        $region15: #{tpu_custom_call.1} parent=11 // pred_region
          %s152 = ssub.s32 128, 128
          %153 = vsyncadd [#allocation6], %s152
          %s155 = sshll.u32 [#allocation5], 4
          %s156 = int_to_ptr.vmem [resolvable:$true] %s155
          %158 = dma.hbm_to_vmem [thread:$0]  %s1, 128, %s156, [#allocation6]
        $region16: #{tpu_custom_call.1} parent=11 // pred_fallthru
          _
        // Predicated region
        $region17: #{tpu_custom_call.1} parent=11 // pred_check
          %p159 = pneg %p86
        $region18: #{tpu_custom_call.1} parent=11 // pred_check_branch
          %161 = sbr.rel (%p159) target = $region20
        $region19: #{tpu_custom_call.1} parent=11 // pred_region
          %s163 = ssub.s32 128, 128
          %164 = vsyncadd [#allocation6], %s163
          %s166 = sshll.u32 [#allocation7], 4
          %s167 = int_to_ptr.vmem [resolvable:$true] %s166
          %169 = dma.hbm_to_vmem [thread:$0]  %s2, 128, %s167, [#allocation6]
        $region20: #{tpu_custom_call.1} parent=11 // pred_fallthru
          _
        // Predicated region
        $region21: #{tpu_custom_call.1} parent=11 // pred_check
          %p170 = pneg %p107
        $region22: #{tpu_custom_call.1} parent=11 // pred_check_branch
          %172 = sbr.rel (%p170) target = $region24
        $region23: #{tpu_custom_call.1} parent=11 // pred_region
          %s174 = ssub.s32 384, 384
          %175 = vsyncadd [#allocation9], %s174
          %s176 = sshll.u32 [#allocation8], 4
          %s177 = int_to_ptr.vmem [resolvable:$true] %s176
          %182 = dma.hbm_to_vmem [thread:$0]  %s3, 384, %s177, [#allocation9], 128, 128, 8
        $region24: #{tpu_custom_call.1} parent=11 // pred_fallthru
          _
      $region12: #{tpu_custom_call.1} parent=5 // pred_fallthru
        _
      %p183 = scmp.lt.s32.totalorder %s18, 2
      // Predicated region
      $region25: #{tpu_custom_call.1} parent=5 // pred_check
        %p184 = pneg %p183
      $region26: #{tpu_custom_call.1} parent=5 // pred_check_branch
        %186 = sbr.rel (%p184) target = $region28
      $region27: #{tpu_custom_call.1} parent=5 // pred_region
        // Predicated region
        $region29: #{tpu_custom_call.1} parent=27 // pred_check
          %p187 = pneg %p38
        $region30: #{tpu_custom_call.1} parent=27 // pred_check_branch
          %189 = sbr.rel (%p187) target = $region32
        $region31: #{tpu_custom_call.1} parent=27 // pred_region
          %s190 = sand.u32 %s28, 1
          %s191 = scalar_lea.sflag [#allocation3], %s190
          %s192 = sand.u32 %s28, 1
          %s193 = smul.addr %s192, 16
          %s194 = scalar_lea.vmem [#allocation2], %s193
          %s196 = ssub.s32 256, 256
          %197 = vsyncadd %s191, %s196
          %s198 = smul.addr %s18, 2
          %s199 = smul.addr %s198, 128
          %s200 = scalar_lea.hbm %s0, %s199
          %s202 = sshll.u32 %s194, 4
          %s203 = int_to_ptr.vmem [resolvable:$true] %s202
          %205 = dma.hbm_to_vmem [thread:$0]  %s200, 256, %s203, %s191
        $region32: #{tpu_custom_call.1} parent=27 // pred_fallthru
          _
      $region28: #{tpu_custom_call.1} parent=5 // pred_fallthru
        _
      %p206 = scmp.le.s32.totalorder 1, %s18
      %p207 = scmp.lt.s32.totalorder %s18, 3
      %p208 = pnand %p206, %p207
      %p209 = pneg %p208
      // Predicated region
      $region33: #{tpu_custom_call.1} parent=5 // pred_check
        _
      $region34: #{tpu_custom_call.1} parent=5 // pred_check_branch
        %211 = sbr.rel (%p208) target = $region36
      $region35: #{tpu_custom_call.1} parent=5 // pred_region
        %s212 = ssub.s32 %s18, 1
        %s213 = sand.u32 %s31, 1
        %s214 = scalar_lea.sflag [#allocation3], %s213
        %s215 = sand.u32 %s31, 1
        %s216 = smul.addr %s215, 16
        %s217 = scalar_lea.vmem [#allocation2], %s216
        // Predicated region
        $region37: #{tpu_custom_call.1} parent=35 // pred_check
          %p218 = pneg %p44
        $region38: #{tpu_custom_call.1} parent=35 // pred_check_branch
          %220 = sbr.rel (%p218) target = $region40
        $region39: #{tpu_custom_call.1} parent=35 // pred_region
          %221 = dma.done %s214, 256
        $region40: #{tpu_custom_call.1} parent=35 // pred_fallthru
          _
        // Predicated region
        $region41: #{tpu_custom_call.1} parent=35 // pred_check
          %p222 = pneg %p65
        $region42: #{tpu_custom_call.1} parent=35 // pred_check_branch
          %224 = sbr.rel (%p222) target = $region44
        $region43: #{tpu_custom_call.1} parent=35 // pred_region
          %225 = dma.done [#allocation6], 128
        $region44: #{tpu_custom_call.1} parent=35 // pred_fallthru
          _
        // Predicated region
        $region45: #{tpu_custom_call.1} parent=35 // pred_check
          %p226 = pneg %p86
        $region46: #{tpu_custom_call.1} parent=35 // pred_check_branch
          %228 = sbr.rel (%p226) target = $region48
        $region47: #{tpu_custom_call.1} parent=35 // pred_region
          %229 = dma.done [#allocation6], 128
        $region48: #{tpu_custom_call.1} parent=35 // pred_fallthru
          _
        // Predicated region
        $region49: #{tpu_custom_call.1} parent=35 // pred_check
          %p230 = pneg %p107
        $region50: #{tpu_custom_call.1} parent=35 // pred_check_branch
          %232 = sbr.rel (%p230) target = $region52
        $region51: #{tpu_custom_call.1} parent=35 // pred_region
          %233 = dma.done [#allocation9], 384
        $region52: #{tpu_custom_call.1} parent=35 // pred_fallthru
          _
        %s234 = sand.u32 %s31, 1
        %s235 = scalar_lea.sflag [#allocation3], %s234
        %s236 = sand.u32 %s31, 1
        %s237 = smul.addr %s236, 16
        %s238 = scalar_lea.vmem [#allocation2], %s237
        %p239 = pneg %p44
        %p240 = pneg %p41
        %p241 = pneg %p65
        %p242 = pneg %p62
        %p243 = pneg %p86
        %p244 = pneg %p83
        %p245 = pneg %p107
        %p246 = pneg %p104
        %p247 = pneg %p133
        %p248 = pneg %p130
        %s249 = sand.u32 %s120, 1
        %s250 = scalar_lea.sflag [#allocation4], %s249
        %s251 = sand.u32 %s120, 1
        %s252 = smul.addr %s251, 16
        %s253 = scalar_lea.vmem [#allocation10], %s252
        %v254 = vld [vmem:[%s217] sm:$0xff]
        %v255 = vld [vmem:[%s217 + $0x8] sm:$0xff]
        %v256 = vld [vmem:[#allocation5] sm:$0xff]
        %v257 = vld [vmem:[#allocation7] sm:$0xff]
        %v258 = vlaneseq
        %v259 = vand.u32 %v258, 127
        %v260 = vadd.s32 %v259, 128
        %vm261 = vcmp.lt.s32.totalorder %v259, 0
        %v262 = vsub.s32 0, %v259
        %v263 = vsel %vm261, %v262, %v259
        %v264 = vshrl.u32 %v263, 4
        %v265 = vand.u32 %v263, 15
        %v266 = vsub.s32 0, %v265
        %v267 = vsel %vm261, %v266, %v265
        %vm268 = vcmp.lt.s32.totalorder %v260, 0
        %v269 = vsub.s32 0, %v260
        %v270 = vsel %vm268, %v269, %v260
        %v271 = vshrl.u32 %v270, 4
        %v272 = vand.u32 %v270, 15
        %v273 = vsub.s32 0, %v272
        %v274 = vsel %vm268, %v273, %v272
        %vm275 = vcmp.ne.s32.totalorder %v267, 0
        %vm276 = vcmp.ne.s32.totalorder %v274, 0
        %vm277 = vcmp.lt.s32.totalorder %v267, 0
        %vm278 = vcmp.lt.s32.totalorder %v274, 0
        %vm279 = vmand %vm277, %vm275
        %vm280 = vmand %vm278, %vm276
        %v281 = vadd.s32 %v267, 16
        %v282 = vadd.s32 %v274, 16
        %v283 = vsel %vm279, %v281, %v267
        %v284 = vsel %vm280, %v282, %v274
        %vm285 = vcmp.ge.s32.totalorder %v283, 1
        %vm286 = vcmp.ge.s32.totalorder %v284, 1
        %vm287 = vcmp.lt.s32.totalorder %v283, 15
        %vm288 = vcmp.lt.s32.totalorder %v284, 15
        %v289 = vadd.f32 %v254, %v255
        %290 = vadd.xlane.f32.xlu0 %v289
        %v291 = vpop.xlane.xlu0 %290
        %v292 = vmul.f32 %v254, %v254
        %v293 = vmul.f32 %v255, %v255
        %v294 = vadd.f32 %v292, %v293
        %295 = vadd.xlane.f32.xlu0 %v294
        %v296 = vpop.xlane.xlu0 %295
        %v297 = vmul.f32 %v291, 0.00390625
        %v298 = vmul.f32 %v296, 0.00390625
        %v299 = vmul.f32 %v297, %v297
        %v300 = vsub.f32 %v298, %v299
        %v301 = vmax.f32 %v300, 0.0
        %v302 = vsub.f32 %v254, %v297
        %v303 = vsub.f32 %v255, %v297
        %v304 = vadd.f32 %v301, 1e-05
        %v305 = vrsqrt.pop %v304
        %v306 = vmul.f32 %v302, %v305
        %v307 = vmul.f32 %v303, %v305
        %310 = vrot.lane.b32.xlu0 %v306, 17
        %v311 = vpop.permute.xlu0 %310
        %312 = vrot.lane.b32.xlu0 %v307, 17
        %v313 = vpop.permute.xlu0 %312
        %vm314 = vcmask 138240
        %v315 = vsel %vm314, %v311, %v313
        %v318 = vsel %vm314, 0.0, %v311
        %v319 = vsel %vm285, 1, 0
        %v320 = vsel %vm286, 1, 0
        %vm321 = vcmp.eq.s32.totalorder %v319, 1
        %vm322 = vcmp.eq.s32.totalorder %v320, 1
        %v323 = vsel %vm321, %v318, 0.0
        %v324 = vsel %vm322, %v315, 0.0
        %326 = vset.pattern.permute.xlu0 0
        %327 = vperm.xlu0 %326, %v256
        %v328 = vpop.permute.xlu0 %327
        %v330 = vmul.f32 %v328, %v323
        %v331 = vmul.f32 %v328, %v324
        %v332 = vadd.f32 %v330, 0.0
        %v333 = vadd.f32 %v331, 0.0
        %334 = vrot.lane.b32.xlu0 %v306, 16
        %v335 = vpop.permute.xlu0 %334
        %336 = vrot.lane.b32.xlu0 %v307, 16
        %v337 = vpop.permute.xlu0 %336
        %vm338 = vcmask 130048
        %v339 = vsel %vm338, %v335, %v337
        %v342 = vsel %vm338, 0.0, %v335
        %343 = vset.pattern.permute.xlu0 1
        %344 = vperm.xlu0 %343, %v256
        %v345 = vpop.permute.xlu0 %344
        %v347 = vmul.f32 %v345, %v342
        %v348 = vmul.f32 %v345, %v339
        %v349 = vadd.f32 %v332, %v347
        %v350 = vadd.f32 %v333, %v348
        %351 = vrot.lane.b32.xlu0 %v306, 15
        %v352 = vpop.permute.xlu0 %351
        %353 = vrot.lane.b32.xlu0 %v307, 15
        %v354 = vpop.permute.xlu0 %353
        %vm355 = vcmask 121856
        %v356 = vsel %vm355, %v352, %v354
        %v359 = vsel %vm355, 0.0, %v352
        %v360 = vsel %vm287, 1, 0
        %v361 = vsel %vm288, 1, 0
        %vm362 = vcmp.eq.s32.totalorder %v360, 1
        %vm363 = vcmp.eq.s32.totalorder %v361, 1
        %v364 = vsel %vm362, %v359, 0.0
        %v365 = vsel %vm363, %v356, 0.0
        %366 = vset.pattern.permute.xlu0 2
        %367 = vperm.xlu0 %366, %v256
        %v368 = vpop.permute.xlu0 %367
        %v370 = vmul.f32 %v368, %v364
        %v371 = vmul.f32 %v368, %v365
        %v372 = vadd.f32 %v349, %v370
        %v373 = vadd.f32 %v350, %v371
        %374 = vrot.lane.b32.xlu0 %v306, 1
        %v375 = vpop.permute.xlu0 %374
        %376 = vrot.lane.b32.xlu0 %v307, 1
        %v377 = vpop.permute.xlu0 %376
        %vm378 = vcmask 7168
        %v379 = vsel %vm378, %v375, %v377
        %v382 = vsel %vm378, 0.0, %v375
        %v383 = vsel %vm321, %v382, 0.0
        %v384 = vsel %vm322, %v379, 0.0
        %385 = vset.pattern.permute.xlu0 3
        %386 = vperm.xlu0 %385, %v256
        %v387 = vpop.permute.xlu0 %386
        %v389 = vmul.f32 %v387, %v383
        %v390 = vmul.f32 %v387, %v384
        %v391 = vadd.f32 %v372, %v389
        %v392 = vadd.f32 %v373, %v390
        %393 = vset.pattern.permute.xlu0 4
        %394 = vperm.xlu0 %393, %v256
        %v395 = vpop.permute.xlu0 %394
        %v397 = vmul.f32 %v395, %v306
        %v398 = vmul.f32 %v395, %v307
        %v399 = vadd.f32 %v391, %v397
        %v400 = vadd.f32 %v392, %v398
        %401 = vrot.lane.b32.xlu0 %v306, 127
        %v402 = vpop.permute.xlu0 %401
        %403 = vrot.lane.b32.xlu0 %v307, 127
        %v404 = vpop.permute.xlu0 %403
        %vm405 = vcmask 1039360
        %v406 = vsel %vm405, %v402, %v404
        %v409 = vsel %vm405, %v404, 0.0
        %v410 = vsel %vm362, %v406, 0.0
        %v411 = vsel %vm363, %v409, 0.0
        %412 = vset.pattern.permute.xlu0 5
        %413 = vperm.xlu0 %412, %v256
        %v414 = vpop.permute.xlu0 %413
        %v416 = vmul.f32 %v414, %v410
        %v417 = vmul.f32 %v414, %v411
        %v418 = vadd.f32 %v399, %v416
        %v419 = vadd.f32 %v400, %v417
        %420 = vrot.lane.b32.xlu0 %v306, 113
        %v421 = vpop.permute.xlu0 %420
        %422 = vrot.lane.b32.xlu0 %v307, 113
        %v423 = vpop.permute.xlu0 %422
        %vm424 = vcmask 924672
        %v425 = vsel %vm424, %v421, %v423
        %v428 = vsel %vm424, %v423, 0.0
        %v429 = vsel %vm321, %v425, 0.0
        %v430 = vsel %vm322, %v428, 0.0
        %431 = vset.pattern.permute.xlu0 6
        %432 = vperm.xlu0 %431, %v256
        %v433 = vpop.permute.xlu0 %432
        %v435 = vmul.f32 %v433, %v429
        %v436 = vmul.f32 %v433, %v430
        %v437 = vadd.f32 %v418, %v435
        %v438 = vadd.f32 %v419, %v436
        %439 = vrot.lane.b32.xlu0 %v306, 112
        %v440 = vpop.permute.xlu0 %439
        %441 = vrot.lane.b32.xlu0 %v307, 112
        %v442 = vpop.permute.xlu0 %441
        %vm443 = vcmask 916480
        %v444 = vsel %vm443, %v440, %v442
        %v447 = vsel %vm443, %v442, 0.0
        %448 = vset.pattern.permute.xlu0 7
        %449 = vperm.xlu0 %448, %v256
        %v450 = vpop.permute.xlu0 %449
        %v452 = vmul.f32 %v450, %v444
        %v453 = vmul.f32 %v450, %v447
        %v454 = vadd.f32 %v437, %v452
        %v455 = vadd.f32 %v438, %v453
        %456 = vrot.lane.b32.xlu0 %v306, 111
        %v457 = vpop.permute.xlu0 %456
        %458 = vrot.lane.b32.xlu0 %v307, 111
        %v459 = vpop.permute.xlu0 %458
        %vm460 = vcmask 908288
        %v461 = vsel %vm460, %v457, %v459
        %v464 = vsel %vm460, %v459, 0.0
        %v465 = vsel %vm362, %v461, 0.0
        %v466 = vsel %vm363, %v464, 0.0
        %467 = vset.pattern.permute.xlu0 8
        %468 = vperm.xlu0 %467, %v256
        %v469 = vpop.permute.xlu0 %468
        %v471 = vmul.f32 %v469, %v465
        %v472 = vmul.f32 %v469, %v466
        %v473 = vadd.f32 %v454, %v471
        %v474 = vadd.f32 %v455, %v472
        %476 = vset.pattern.permute.xlu0 0
        %477 = vperm.xlu0 %476, %v257
        %v478 = vpop.permute.xlu0 %477
        %v480 = vadd.f32 %v473, %v478
        %v481 = vadd.f32 %v474, %v478
        %v482 = vld [vmem:[#allocation8] sm:$0xff]
        %483 = vset.pattern.permute.xlu0 1
        %484 = vperm.xlu0 %483, %v257
        %v485 = vpop.permute.xlu0 %484
        %vm487 = vcmask 64512
        %v489 = vsel %vm487, %v482, 0
        %491 = vmatprep.subr.mxu0 %v481
        %492 = vmatpush1.msra.mxu0 %v480
        %493 = vmatprep.subr.mxu0 0.0
        %494 = vmatpush1.msra.mxu0 0.0
        %495 = vmatprep.subr.mxu0 0.0
        %496 = vmatpush1.msra.mxu0 0.0
        %497 = vmatprep.subr.mxu0 0.0
        %498 = vmatpush1.msra.mxu0 0.0
        %499 = vmatprep.subr.mxu0 0.0
        %500 = vmatpush1.msra.mxu0 0.0
        %501 = vmatprep.subr.mxu0 0.0
        %502 = vmatpush1.msra.mxu0 0.0
        %503 = vmatprep.subr.mxu0 0.0
        %504 = vmatpush1.msra.mxu0 0.0
        %505 = vmatprep.subr.mxu0 0.0
        %506 = vmatpush1.msra.mxu0 0.0
        %507 = vmatprep.subr.mxu0 0.0
        %508 = vmatpush1.msra.mxu0 0.0
        %509 = vmatprep.subr.mxu0 0.0
        %510 = vmatpush1.msra.mxu0 0.0
        %511 = vmatprep.subr.mxu0 0.0
        %512 = vmatpush1.msra.mxu0 0.0
        %513 = vmatprep.subr.mxu0 0.0
        %514 = vmatpush1.msra.mxu0 0.0
        %515 = vmatprep.subr.mxu0 0.0
        %516 = vmatpush1.msra.mxu0 0.0
        %517 = vmatprep.subr.mxu0 0.0
        %518 = vmatpush1.msra.mxu0 0.0
        %519 = vmatprep.subr.mxu0 0.0
        %520 = vmatpush1.msra.mxu0 0.0
        %521 = vmatprep.subr.mxu0 0.0
        %522 = vmatpush1.msra.mxu0 0.0
        %523 = vmatprep.subr.mxu0 0.0
        %524 = vmatpush1.msra.mxu0 0.0
        %525 = vmatprep.subr.mxu0 0.0
        %526 = vmatpush1.msra.mxu0 0.0
        %527 = vmatprep.subr.mxu0 0.0
        %528 = vmatpush1.msra.mxu0 0.0
        %529 = vmatprep.subr.mxu0 0.0
        %530 = vmatpush1.msra.mxu0 0.0
        %531 = vmatprep.subr.mxu0 0.0
        %532 = vmatpush1.msra.mxu0 0.0
        %533 = vmatprep.subr.mxu0 0.0
        %534 = vmatpush1.msra.mxu0 0.0
        %535 = vmatprep.subr.mxu0 0.0
        %536 = vmatpush1.msra.mxu0 0.0
        %537 = vmatprep.subr.mxu0 0.0
        %538 = vmatpush1.msra.mxu0 0.0
        %539 = vmatprep.subr.mxu0 0.0
        %540 = vmatpush1.msra.mxu0 0.0
        %541 = vmatprep.subr.mxu0 0.0
        %542 = vmatpush1.msra.mxu0 0.0
        %543 = vmatprep.subr.mxu0 0.0
        %544 = vmatpush1.msra.mxu0 0.0
        %545 = vmatprep.subr.mxu0 0.0
        %546 = vmatpush1.msra.mxu0 0.0
        %547 = vmatprep.subr.mxu0 0.0
        %548 = vmatpush1.msra.mxu0 0.0
        %549 = vmatprep.subr.mxu0 0.0
        %550 = vmatpush1.msra.mxu0 0.0
        %551 = vmatprep.subr.mxu0 0.0
        %552 = vmatpush1.msra.mxu0 0.0
        %553 = vmatprep.subr.mxu0 0.0
        %554 = vmatpush1.msra.mxu0 0.0
        %555 = vmatprep.mubr.f32.mxu0 0.0
        %556 = vmatmul.mubr.f32.gmra.mrb[0].mxu0 %v489
        %v557 = vpop.f32.mrb[0].mxu0
        %v558 = vadd.f32 %v485, %v557
        %v559 = vpop.f32.mrb[0].mxu0
        %v560 = vadd.f32 %v485, %v559
        %561 = vdwg.mxu0
        %v562 = vmax.f32 %v558, 0.0
        %v563 = vmax.f32 %v560, 0.0
        %s564 = scalar_lea.vmem [#allocation8], 8
        %v565 = vld [vmem:[%s564] sm:$0xff]
        %566 = vset.pattern.permute.xlu0 2
        %567 = vperm.xlu0 %566, %v257
        %v568 = vpop.permute.xlu0 %567
        %v571 = vsel %vm487, %v565, 0
        %573 = vmatprep.subr.mxu0 %v307
        %574 = vmatpush1.msra.mxu0 %v306
        %575 = vmatprep.subr.mxu0 0.0
        %576 = vmatpush1.msra.mxu0 0.0
        %577 = vmatprep.subr.mxu0 0.0
        %578 = vmatpush1.msra.mxu0 0.0
        %579 = vmatprep.subr.mxu0 0.0
        %580 = vmatpush1.msra.mxu0 0.0
        %581 = vmatprep.subr.mxu0 0.0
        %582 = vmatpush1.msra.mxu0 0.0
        %583 = vmatprep.subr.mxu0 0.0
        %584 = vmatpush1.msra.mxu0 0.0
        %585 = vmatprep.subr.mxu0 0.0
        %586 = vmatpush1.msra.mxu0 0.0
        %587 = vmatprep.subr.mxu0 0.0
        %588 = vmatpush1.msra.mxu0 0.0
        %589 = vmatprep.subr.mxu0 0.0
        %590 = vmatpush1.msra.mxu0 0.0
        %591 = vmatprep.subr.mxu0 0.0
        %592 = vmatpush1.msra.mxu0 0.0
        %593 = vmatprep.subr.mxu0 0.0
        %594 = vmatpush1.msra.mxu0 0.0
        %595 = vmatprep.subr.mxu0 0.0
        %596 = vmatpush1.msra.mxu0 0.0
        %597 = vmatprep.subr.mxu0 0.0
        %598 = vmatpush1.msra.mxu0 0.0
        %599 = vmatprep.subr.mxu0 0.0
        %600 = vmatpush1.msra.mxu0 0.0
        %601 = vmatprep.subr.mxu0 0.0
        %602 = vmatpush1.msra.mxu0 0.0
        %603 = vmatprep.subr.mxu0 0.0
        %604 = vmatpush1.msra.mxu0 0.0
        %605 = vmatprep.subr.mxu0 0.0
        %606 = vmatpush1.msra.mxu0 0.0
        %607 = vmatprep.subr.mxu0 0.0
        %608 = vmatpush1.msra.mxu0 0.0
        %609 = vmatprep.subr.mxu0 0.0
        %610 = vmatpush1.msra.mxu0 0.0
        %611 = vmatprep.subr.mxu0 0.0
        %612 = vmatpush1.msra.mxu0 0.0
        %613 = vmatprep.subr.mxu0 0.0
        %614 = vmatpush1.msra.mxu0 0.0
        %615 = vmatprep.subr.mxu0 0.0
        %616 = vmatpush1.msra.mxu0 0.0
        %617 = vmatprep.subr.mxu0 0.0
        %618 = vmatpush1.msra.mxu0 0.0
        %619 = vmatprep.subr.mxu0 0.0
        %620 = vmatpush1.msra.mxu0 0.0
        %621 = vmatprep.subr.mxu0 0.0
        %622 = vmatpush1.msra.mxu0 0.0
        %623 = vmatprep.subr.mxu0 0.0
        %624 = vmatpush1.msra.mxu0 0.0
        %625 = vmatprep.subr.mxu0 0.0
        %626 = vmatpush1.msra.mxu0 0.0
        %627 = vmatprep.subr.mxu0 0.0
        %628 = vmatpush1.msra.mxu0 0.0
        %629 = vmatprep.subr.mxu0 0.0
        %630 = vmatpush1.msra.mxu0 0.0
        %631 = vmatprep.subr.mxu0 0.0
        %632 = vmatpush1.msra.mxu0 0.0
        %633 = vmatprep.subr.mxu0 0.0
        %634 = vmatpush1.msra.mxu0 0.0
        %635 = vmatprep.subr.mxu0 0.0
        %636 = vmatpush1.msra.mxu0 0.0
        %637 = vmatprep.mubr.f32.mxu0 0.0
        %638 = vmatmul.mubr.f32.gmra.mrb[0].mxu0 %v571
        %v639 = vpop.f32.mrb[0].mxu0
        %v640 = vadd.f32 %v568, %v639
        %v641 = vpop.f32.mrb[0].mxu0
        %v642 = vadd.f32 %v568, %v641
        %643 = vdwg.mxu0
        %v644 = vmax.f32 %v640, 0.0
        %v645 = vmax.f32 %v642, 0.0
        %v646 = vadd.f32 %v562, %v644
        %v647 = vadd.f32 %v563, %v645
        %v648 = vadd.f32 %v646, %v647
        %649 = vadd.xlane.f32.xlu0 %v648
        %v650 = vpop.xlane.xlu0 %649
        %v651 = vmul.f32 %v646, %v646
        %v652 = vmul.f32 %v647, %v647
        %v653 = vadd.f32 %v651, %v652
        %654 = vadd.xlane.f32.xlu0 %v653
        %v655 = vpop.xlane.xlu0 %654
        %v656 = vmul.f32 %v650, 0.00390625
        %v657 = vmul.f32 %v655, 0.00390625
        %v658 = vmul.f32 %v656, %v656
        %v659 = vsub.f32 %v657, %v658
        %v660 = vmax.f32 %v659, 0.0
        %v661 = vsub.f32 %v646, %v656
        %v662 = vsub.f32 %v647, %v656
        %v663 = vadd.f32 %v660, 1e-05
        %v664 = vrsqrt.pop %v663
        %v665 = vmul.f32 %v661, %v664
        %v666 = vmul.f32 %v662, %v664
        %669 = vrot.lane.b32.xlu0 %v665, 17
        %v670 = vpop.permute.xlu0 %669
        %671 = vrot.lane.b32.xlu0 %v666, 17
        %v672 = vpop.permute.xlu0 %671
        %v673 = vsel %vm314, %v670, %v672
        %v676 = vsel %vm314, 0.0, %v670
        %v677 = vsel %vm321, %v676, 0.0
        %v678 = vsel %vm322, %v673, 0.0
        %679 = vset.pattern.permute.xlu0 9
        %680 = vperm.xlu0 %679, %v256
        %v681 = vpop.permute.xlu0 %680
        %v683 = vmul.f32 %v681, %v677
        %v684 = vmul.f32 %v681, %v678
        %v685 = vadd.f32 %v683, 0.0
        %v686 = vadd.f32 %v684, 0.0
        %687 = vrot.lane.b32.xlu0 %v665, 16
        %v688 = vpop.permute.xlu0 %687
        %689 = vrot.lane.b32.xlu0 %v666, 16
        %v690 = vpop.permute.xlu0 %689
        %v691 = vsel %vm338, %v688, %v690
        %v694 = vsel %vm338, 0.0, %v688
        %695 = vset.pattern.permute.xlu0 10
        %696 = vperm.xlu0 %695, %v256
        %v697 = vpop.permute.xlu0 %696
        %v699 = vmul.f32 %v697, %v694
        %v700 = vmul.f32 %v697, %v691
        %v701 = vadd.f32 %v685, %v699
        %v702 = vadd.f32 %v686, %v700
        %703 = vrot.lane.b32.xlu0 %v665, 15
        %v704 = vpop.permute.xlu0 %703
        %705 = vrot.lane.b32.xlu0 %v666, 15
        %v706 = vpop.permute.xlu0 %705
        %v707 = vsel %vm355, %v704, %v706
        %v710 = vsel %vm355, 0.0, %v704
        %v711 = vsel %vm362, %v710, 0.0
        %v712 = vsel %vm363, %v707, 0.0
        %713 = vset.pattern.permute.xlu0 11
        %714 = vperm.xlu0 %713, %v256
        %v715 = vpop.permute.xlu0 %714
        %v717 = vmul.f32 %v715, %v711
        %v718 = vmul.f32 %v715, %v712
        %v719 = vadd.f32 %v701, %v717
        %v720 = vadd.f32 %v702, %v718
        %721 = vrot.lane.b32.xlu0 %v665, 1
        %v722 = vpop.permute.xlu0 %721
        %723 = vrot.lane.b32.xlu0 %v666, 1
        %v724 = vpop.permute.xlu0 %723
        %v725 = vsel %vm378, %v722, %v724
        %v728 = vsel %vm378, 0.0, %v722
        %v729 = vsel %vm321, %v728, 0.0
        %v730 = vsel %vm322, %v725, 0.0
        %731 = vset.pattern.permute.xlu0 12
        %732 = vperm.xlu0 %731, %v256
        %v733 = vpop.permute.xlu0 %732
        %v735 = vmul.f32 %v733, %v729
        %v736 = vmul.f32 %v733, %v730
        %v737 = vadd.f32 %v719, %v735
        %v738 = vadd.f32 %v720, %v736
        %739 = vset.pattern.permute.xlu0 13
        %740 = vperm.xlu0 %739, %v256
        %v741 = vpop.permute.xlu0 %740
        %v743 = vmul.f32 %v741, %v665
        %v744 = vmul.f32 %v741, %v666
        %v745 = vadd.f32 %v737, %v743
        %v746 = vadd.f32 %v738, %v744
        %747 = vrot.lane.b32.xlu0 %v665, 127
        %v748 = vpop.permute.xlu0 %747
        %749 = vrot.lane.b32.xlu0 %v666, 127
        %v750 = vpop.permute.xlu0 %749
        %v751 = vsel %vm405, %v748, %v750
        %v754 = vsel %vm405, %v750, 0.0
        %v755 = vsel %vm362, %v751, 0.0
        %v756 = vsel %vm363, %v754, 0.0
        %757 = vset.pattern.permute.xlu0 14
        %758 = vperm.xlu0 %757, %v256
        %v759 = vpop.permute.xlu0 %758
        %v761 = vmul.f32 %v759, %v755
        %v762 = vmul.f32 %v759, %v756
        %v763 = vadd.f32 %v745, %v761
        %v764 = vadd.f32 %v746, %v762
        %765 = vrot.lane.b32.xlu0 %v665, 113
        %v766 = vpop.permute.xlu0 %765
        %767 = vrot.lane.b32.xlu0 %v666, 113
        %v768 = vpop.permute.xlu0 %767
        %v769 = vsel %vm424, %v766, %v768
        %v772 = vsel %vm424, %v768, 0.0
        %v773 = vsel %vm321, %v769, 0.0
        %v774 = vsel %vm322, %v772, 0.0
        %775 = vset.pattern.permute.xlu0 15
        %776 = vperm.xlu0 %775, %v256
        %v777 = vpop.permute.xlu0 %776
        %v779 = vmul.f32 %v777, %v773
        %v780 = vmul.f32 %v777, %v774
        %v781 = vadd.f32 %v763, %v779
        %v782 = vadd.f32 %v764, %v780
        %783 = vrot.lane.b32.xlu0 %v665, 112
        %v784 = vpop.permute.xlu0 %783
        %785 = vrot.lane.b32.xlu0 %v666, 112
        %v786 = vpop.permute.xlu0 %785
        %v787 = vsel %vm443, %v784, %v786
        %v790 = vsel %vm443, %v786, 0.0
        %791 = vset.pattern.permute.xlu0 16
        %792 = vperm.xlu0 %791, %v256
        %v793 = vpop.permute.xlu0 %792
        %v795 = vmul.f32 %v793, %v787
        %v796 = vmul.f32 %v793, %v790
        %v797 = vadd.f32 %v781, %v795
        %v798 = vadd.f32 %v782, %v796
        %799 = vrot.lane.b32.xlu0 %v665, 111
        %v800 = vpop.permute.xlu0 %799
        %801 = vrot.lane.b32.xlu0 %v666, 111
        %v802 = vpop.permute.xlu0 %801
        %v803 = vsel %vm460, %v800, %v802
        %v806 = vsel %vm460, %v802, 0.0
        %v807 = vsel %vm362, %v803, 0.0
        %v808 = vsel %vm363, %v806, 0.0
        %809 = vset.pattern.permute.xlu0 17
        %810 = vperm.xlu0 %809, %v256
        %v811 = vpop.permute.xlu0 %810
        %v813 = vmul.f32 %v811, %v807
        %v814 = vmul.f32 %v811, %v808
        %v815 = vadd.f32 %v797, %v813
        %v816 = vadd.f32 %v798, %v814
        %817 = vset.pattern.permute.xlu0 3
        %818 = vperm.xlu0 %817, %v257
        %v819 = vpop.permute.xlu0 %818
        %v821 = vadd.f32 %v815, %v819
        %v822 = vadd.f32 %v816, %v819
        %s823 = scalar_lea.vmem [#allocation8], 16
        %v824 = vld [vmem:[%s823] sm:$0xff]
        %825 = vset.pattern.permute.xlu0 4
        %826 = vperm.xlu0 %825, %v257
        %v827 = vpop.permute.xlu0 %826
        %v830 = vsel %vm487, %v824, 0
        %832 = vmatprep.subr.mxu0 %v822
        %833 = vmatpush1.msra.mxu0 %v821
        %834 = vmatprep.subr.mxu0 0.0
        %835 = vmatpush1.msra.mxu0 0.0
        %836 = vmatprep.subr.mxu0 0.0
        %837 = vmatpush1.msra.mxu0 0.0
        %838 = vmatprep.subr.mxu0 0.0
        %839 = vmatpush1.msra.mxu0 0.0
        %840 = vmatprep.subr.mxu0 0.0
        %841 = vmatpush1.msra.mxu0 0.0
        %842 = vmatprep.subr.mxu0 0.0
        %843 = vmatpush1.msra.mxu0 0.0
        %844 = vmatprep.subr.mxu0 0.0
        %845 = vmatpush1.msra.mxu0 0.0
        %846 = vmatprep.subr.mxu0 0.0
        %847 = vmatpush1.msra.mxu0 0.0
        %848 = vmatprep.subr.mxu0 0.0
        %849 = vmatpush1.msra.mxu0 0.0
        %850 = vmatprep.subr.mxu0 0.0
        %851 = vmatpush1.msra.mxu0 0.0
        %852 = vmatprep.subr.mxu0 0.0
        %853 = vmatpush1.msra.mxu0 0.0
        %854 = vmatprep.subr.mxu0 0.0
        %855 = vmatpush1.msra.mxu0 0.0
        %856 = vmatprep.subr.mxu0 0.0
        %857 = vmatpush1.msra.mxu0 0.0
        %858 = vmatprep.subr.mxu0 0.0
        %859 = vmatpush1.msra.mxu0 0.0
        %860 = vmatprep.subr.mxu0 0.0
        %861 = vmatpush1.msra.mxu0 0.0
        %862 = vmatprep.subr.mxu0 0.0
        %863 = vmatpush1.msra.mxu0 0.0
        %864 = vmatprep.subr.mxu0 0.0
        %865 = vmatpush1.msra.mxu0 0.0
        %866 = vmatprep.subr.mxu0 0.0
        %867 = vmatpush1.msra.mxu0 0.0
        %868 = vmatprep.subr.mxu0 0.0
        %869 = vmatpush1.msra.mxu0 0.0
        %870 = vmatprep.subr.mxu0 0.0
        %871 = vmatpush1.msra.mxu0 0.0
        %872 = vmatprep.subr.mxu0 0.0
        %873 = vmatpush1.msra.mxu0 0.0
        %874 = vmatprep.subr.mxu0 0.0
        %875 = vmatpush1.msra.mxu0 0.0
        %876 = vmatprep.subr.mxu0 0.0
        %877 = vmatpush1.msra.mxu0 0.0
        %878 = vmatprep.subr.mxu0 0.0
        %879 = vmatpush1.msra.mxu0 0.0
        %880 = vmatprep.subr.mxu0 0.0
        %881 = vmatpush1.msra.mxu0 0.0
        %882 = vmatprep.subr.mxu0 0.0
        %883 = vmatpush1.msra.mxu0 0.0
        %884 = vmatprep.subr.mxu0 0.0
        %885 = vmatpush1.msra.mxu0 0.0
        %886 = vmatprep.subr.mxu0 0.0
        %887 = vmatpush1.msra.mxu0 0.0
        %888 = vmatprep.subr.mxu0 0.0
        %889 = vmatpush1.msra.mxu0 0.0
        %890 = vmatprep.subr.mxu0 0.0
        %891 = vmatpush1.msra.mxu0 0.0
        %892 = vmatprep.subr.mxu0 0.0
        %893 = vmatpush1.msra.mxu0 0.0
        %894 = vmatprep.subr.mxu0 0.0
        %895 = vmatpush1.msra.mxu0 0.0
        %896 = vmatprep.mubr.f32.mxu0 0.0
        %897 = vmatmul.mubr.f32.gmra.mrb[0].mxu0 %v830
        %v898 = vpop.f32.mrb[0].mxu0
        %v899 = vadd.f32 %v827, %v898
        %v900 = vpop.f32.mrb[0].mxu0
        %v901 = vadd.f32 %v827, %v900
        %902 = vdwg.mxu0
        %v903 = vmax.f32 %v899, 0.0
        %v904 = vmax.f32 %v901, 0.0
        %v905 = vadd.f32 %v903, %v254
        %v906 = vadd.f32 %v904, %v255
        %907 = vst [vmem:[%s253] sm:$0xff] %v905
        %908 = vst [vmem:[%s253 + $0x8] sm:$0xff] %v906
        %s909 = sand.u32 %s120, 1
        %s910 = scalar_lea.sflag [#allocation4], %s909
        %s911 = sand.u32 %s120, 1
        %s912 = smul.addr %s911, 16
        %s913 = scalar_lea.vmem [#allocation10], %s912
        // Predicated region
        $region53: #{tpu_custom_call.1} parent=35 // pred_check
          %p914 = pneg %p130
        $region54: #{tpu_custom_call.1} parent=35 // pred_check_branch
          %916 = sbr.rel (%p914) target = $region56
        $region55: #{tpu_custom_call.1} parent=35 // pred_region
          %s918 = ssub.s32 256, 256
          %919 = vsyncadd %s910, %s918
          %s920 = smul.addr %s23, 2
          %s921 = smul.addr %s920, 128
          %s922 = scalar_lea.hbm %s4, %s921
          %s924 = sshll.u32 %s913, 4
          %s925 = int_to_ptr.vmem [resolvable:$true] %s924
          %927 = dma.vmem_to_hbm [thread:$0]  %s925, 256, %s922, %s910
        $region56: #{tpu_custom_call.1} parent=35 // pred_fallthru
          _
      $region36: #{tpu_custom_call.1} parent=5 // pred_fallthru
        _
      %p928 = scmp.le.s32.totalorder 2, %s18
      // Predicated region
      $region57: #{tpu_custom_call.1} parent=5 // pred_check
        %p929 = pneg %p928
      $region58: #{tpu_custom_call.1} parent=5 // pred_check_branch
        %931 = sbr.rel (%p929) target = $region60
      $region59: #{tpu_custom_call.1} parent=5 // pred_region
        %s932 = ssub.s32 %s18, 2
        // Predicated region
        $region61: #{tpu_custom_call.1} parent=59 // pred_check
          %p933 = pneg %p136
        $region62: #{tpu_custom_call.1} parent=59 // pred_check_branch
          %935 = sbr.rel (%p933) target = $region64
        $region63: #{tpu_custom_call.1} parent=59 // pred_region
          %s936 = sand.u32 %s121, 1
          %s937 = scalar_lea.sflag [#allocation4], %s936
          %s938 = sand.u32 %s121, 1
          %s939 = smul.addr %s938, 16
          %s940 = scalar_lea.vmem [#allocation10], %s939
          %941 = dma.done %s937, 256
        $region64: #{tpu_custom_call.1} parent=59 // pred_fallthru
          _
      $region60: #{tpu_custom_call.1} parent=5 // pred_fallthru
        _
    $region6: #{tpu_custom_call.1} parent=1 // loop_footer
      %s22 = sadd.s32 1, %s18
    $region7: #{tpu_custom_call.1} parent=1 // loop_footer_branch
      %17 = sbr.rel target = $region3
    $region8: #{tpu_custom_call.1} parent=1 // loop_exit
      _
    %942 = vsyncpa [#allocation3], 1
    %s943 = scalar_lea.sflag [#allocation3], 1
    %944 = vsyncpa %s943, 1
    %945 = vsyncpa [#allocation6], 1
    %946 = vsyncpa [#allocation9], 1
    %947 = vsyncpa [#allocation4], 1
    %s948 = scalar_lea.sflag [#allocation4], 1
    %949 = vsyncpa %s948, 1

</llo_original>
